<compile_context>
chip_gen: v7x
topology: tpu7x:2x2x1
jax: 0.10.0
libtpu: 0.0.40
codegen_flags: <defaults>
</compile_context>

<pallas_src>
import functools

import jax
import jax.numpy as jnp
from jax import lax
from jax.experimental import pallas as pl
from jax.experimental.pallas import tpu as pltpu


def _ls_ce_kernel(x_ref, t_ref, o_ref, *, smoothing, temperature, n_rows):
    i = pl.program_id(0)
    inv_t = jnp.float32(1.0 / temperature)

    xf = x_ref[...].astype(jnp.float32)                                   # (TB, C)
    t = t_ref[...]                                                        # (TB, 1) int32
    TB, C = xf.shape

    # Row-wise reductions directly on x (1/T applied algebraically below).
    mx = jnp.max(xf, axis=-1, keepdims=True)                              # (TB, 1)
    sum_x = jnp.sum(xf, axis=-1, keepdims=True)                           # (TB, 1)

    # Gather x[row, target[row]] via a lane-iota one-hot select fused into the sum
    # (no transposes / gathers, no extra full-tile temporaries).
    col = lax.broadcasted_iota(jnp.int32, (TB, C), 1)
    x_t = jnp.sum(jnp.where(col == t, xf, 0.0), axis=-1, keepdims=True)   # (TB, 1)

    # Stable log-sum-exp of x/T: only this pass touches every element again.
    lse = mx * inv_t + jnp.log(
        jnp.sum(jnp.exp((xf - mx) * inv_t), axis=-1, keepdims=True))      # (TB, 1)

    mean_z = sum_x * (inv_t / C)                                          # (TB, 1)
    z_t = x_t * inv_t                                                     # (TB, 1)

    #   nll    = lse - z_t
    #   smooth = lse - mean_z
    #   loss   = (1-s)*nll + s*smooth = lse - (1-s)*z_t - s*mean_z
    per_row = lse - (1.0 - smoothing) * z_t - smoothing * mean_z          # (TB, 1)

    # Rows beyond the true batch (ragged last block) carry garbage; select them to 0.
    # Keep this a select (jnp.where), not a multiply, so NaN/Inf cannot leak through.
    gid = i * TB + lax.broadcasted_iota(jnp.int32, (TB, 1), 0)
    o_ref[...] = jnp.where(gid < n_rows, per_row, 0.0)


def label_smoothing_cross_entropy(x, target, smoothing=0.1, temperature=1.0,
                                  vmem_budget_bytes=16 * 1024 * 1024):
    """x: (B, C) logits (any float dtype); target: (B,) int class indices. Scalar loss."""
    B, C = x.shape
    itemsize = jnp.dtype(x.dtype).itemsize

    # Per-row VMEM cost estimate: double-buffered input block + ~2 full-width f32 temps.
    per_row_bytes = C * (2 * itemsize + 8)
    tb = vmem_budget_bytes // per_row_bytes
    tb = max(8, min(1024, tb) // 8 * 8)          # multiple of 8 sublanes, sane cap
    tb = min(tb, (B + 7) // 8 * 8)               # never bigger than the (rounded) batch
    grid = pl.cdiv(B, tb)                        # ragged last block allowed; no x pad

    t2 = target.astype(jnp.int32).reshape(B, 1)  # tiny; only reshaped, never padded

    per_row = pl.pallas_call(
        functools.partial(
            _ls_ce_kernel,
            smoothing=float(smoothing),
            temperature=float(temperature),
            n_rows=B,
        ),
        out_shape=jax.ShapeDtypeStruct((B, 1), jnp.float32),
        grid=(grid,),
        in_specs=[
            pl.BlockSpec((tb, C), lambda i: (i, 0)),
            pl.BlockSpec((tb, 1), lambda i: (i, 0)),
        ],
        out_specs=pl.BlockSpec((tb, 1), lambda i: (i, 0)),
        compiler_params=pltpu.CompilerParams(
            dimension_semantics=("parallel",),       # disjoint output blocks -> megacore OK
            vmem_limit_bytes=32 * 1024 * 1024,
        ),
    )(x, t2)

    # Final mean over rows in plain JAX (accurate and trivially cheap: B floats).
    return jnp.sum(per_row) / jnp.float32(B)


def _reference(x, target, smoothing=0.1, temperature=1.0):
    log_probs = jax.nn.log_softmax(x.astype(jnp.float32) / temperature, axis=-1)
    nll = -jnp.take_along_axis(log_probs, target[:, None].astype(jnp.int32), axis=-1)[:, 0]
    smooth = -jnp.mean(log_probs, axis=-1)
    return jnp.mean((1.0 - smoothing) * nll + smoothing * smooth)


if __name__ == "__main__":
    key = jax.random.PRNGKey(0)
    kx, kt = jax.random.split(key)

    # Small shapes consistent with the module: (batch, num_classes) logits + int targets.
    B, C = 8, 32
    x = jax.random.normal(kx, (B, C), dtype=jnp.float32)
    target = jax.random.randint(kt, (B,), 0, C, dtype=jnp.int32)

    loss = label_smoothing_cross_entropy(x, target, smoothing=0.1, temperature=1.0)
    loss = jax.block_until_ready(loss)
    ref = _reference(x, target, smoothing=0.1, temperature=1.0)
    assert jnp.allclose(loss, ref, atol=1e-4, rtol=1e-4), (loss, ref)

    # Ragged batch (not a multiple of 8): exercises the overhanging last block / row mask.
    kx2, kt2 = jax.random.split(kt)
    B2 = 13
    x2 = jax.random.normal(kx2, (B2, C), dtype=jnp.float32)
    t2 = jax.random.randint(kt2, (B2,), 0, C, dtype=jnp.int32)
    loss2 = jax.block_until_ready(
        label_smoothing_cross_entropy(x2, t2, smoothing=0.1, temperature=2.0))
    ref2 = _reference(x2, t2, smoothing=0.1, temperature=2.0)
    assert jnp.allclose(loss2, ref2, atol=1e-4, rtol=1e-4), (loss2, ref2)

    print("KERNEL_OK")
</pallas_src>

<mosaic_0001>
module attributes {stable_mosaic.version = 11 : i64} {
  func.func @_ls_ce_kernel(%arg0: i32, %arg1: memref<8x32xf32, #tpu.memory_space<vmem>>, %arg2: memref<8x1xi32, #tpu.memory_space<vmem>>, %arg3: memref<8x1xf32, #tpu.memory_space<vmem>>) attributes {dimension_semantics = [#tpu.dimension_semantics<parallel>], iteration_bounds = array<i64: 1>, scalar_prefetch = 0 : i64, scratch_operands = 0 : i64, tpu.core_type = #tpu.core_type<tc>, window_params = [{transform_indices = @transform_0, window_bounds = array<i64: 8, 32>}, {transform_indices = @transform_1, window_bounds = array<i64: 8, 1>}, {transform_indices = @transform_2, window_bounds = array<i64: 8, 1>}]} {
    %c0 = arith.constant 0 : index
    %c0_0 = arith.constant 0 : index
    %0 = vector.load %arg1[%c0, %c0_0] : memref<8x32xf32, #tpu.memory_space<vmem>>, vector<8x32xf32>
    %c0_1 = arith.constant 0 : index
    %c0_2 = arith.constant 0 : index
    %1 = vector.load %arg2[%c0_1, %c0_2] : memref<8x1xi32, #tpu.memory_space<vmem>>, vector<8x1xi32>
    %cst = arith.constant dense<0xFF800000> : vector<8xf32>
    %2 = vector.multi_reduction <maximumf>, %0, %cst [1] : vector<8x32xf32> to vector<8xf32>
    %3 = vector.shape_cast %2 : vector<8xf32> to vector<8x1xf32>
    %cst_3 = arith.constant dense<0.000000e+00> : vector<8xf32>
    %4 = vector.multi_reduction <add>, %0, %cst_3 [1] : vector<8x32xf32> to vector<8xf32>
    %5 = vector.shape_cast %4 : vector<8xf32> to vector<8x1xf32>
    %6 = tpu.iota {dimensions = array<i32: 1>} : vector<8x32xi32>
    %7 = vector.broadcast %1 : vector<8x1xi32> to vector<8x32xi32>
    %8 = arith.cmpi eq, %6, %7 : vector<8x32xi32>
    %cst_4 = arith.constant 0.000000e+00 : f32
    %9 = vector.broadcast %cst_4 : f32 to vector<8x32xf32>
    %10 = arith.select %8, %0, %9 : vector<8x32xi1>, vector<8x32xf32>
    %cst_5 = arith.constant dense<0.000000e+00> : vector<8xf32>
    %11 = vector.multi_reduction <add>, %10, %cst_5 [1] : vector<8x32xf32> to vector<8xf32>
    %12 = vector.shape_cast %11 : vector<8xf32> to vector<8x1xf32>
    %cst_6 = arith.constant 1.000000e+00 : f32
    %13 = vector.broadcast %cst_6 : f32 to vector<8x1xf32>
    %14 = arith.mulf %3, %13 : vector<8x1xf32>
    %15 = vector.broadcast %3 : vector<8x1xf32> to vector<8x32xf32>
    %16 = arith.subf %0, %15 : vector<8x32xf32>
    %cst_7 = arith.constant 1.000000e+00 : f32
    %17 = vector.broadcast %cst_7 : f32 to vector<8x32xf32>
    %18 = arith.mulf %16, %17 : vector<8x32xf32>
    %19 = math.exp %18 : vector<8x32xf32>
    %cst_8 = arith.constant dense<0.000000e+00> : vector<8xf32>
    %20 = vector.multi_reduction <add>, %19, %cst_8 [1] : vector<8x32xf32> to vector<8xf32>
    %21 = vector.shape_cast %20 : vector<8xf32> to vector<8x1xf32>
    %22 = math.log %21 : vector<8x1xf32>
    %23 = arith.addf %14, %22 : vector<8x1xf32>
    %cst_9 = arith.constant 1.000000e+00 : f32
    %cst_10 = arith.constant 3.200000e+01 : f32
    %24 = arith.divf %cst_9, %cst_10 : f32
    %25 = vector.broadcast %24 : f32 to vector<8x1xf32>
    %26 = arith.mulf %5, %25 : vector<8x1xf32>
    %cst_11 = arith.constant 1.000000e+00 : f32
    %27 = vector.broadcast %cst_11 : f32 to vector<8x1xf32>
    %28 = arith.mulf %12, %27 : vector<8x1xf32>
    %cst_12 = arith.constant 0.899999976 : f32
    %29 = vector.broadcast %cst_12 : f32 to vector<8x1xf32>
    %30 = arith.mulf %29, %28 : vector<8x1xf32>
    %31 = arith.subf %23, %30 : vector<8x1xf32>
    %cst_13 = arith.constant 1.000000e-01 : f32
    %32 = vector.broadcast %cst_13 : f32 to vector<8x1xf32>
    %33 = arith.mulf %32, %26 : vector<8x1xf32>
    %34 = arith.subf %31, %33 : vector<8x1xf32>
    %c8_i32 = arith.constant 8 : i32
    %35 = arith.muli %arg0, %c8_i32 : i32
    %36 = tpu.iota {dimensions = array<i32: 0>} : vector<8x1xi32>
    %37 = vector.broadcast %35 : i32 to vector<8x1xi32>
    %38 = arith.addi %37, %36 : vector<8x1xi32>
    %c8_i32_14 = arith.constant 8 : i32
    %39 = vector.broadcast %c8_i32_14 : i32 to vector<8x1xi32>
    %40 = arith.cmpi slt, %38, %39 : vector<8x1xi32>
    %cst_15 = arith.constant 0.000000e+00 : f32
    %41 = vector.broadcast %cst_15 : f32 to vector<8x1xf32>
    %42 = arith.select %40, %34, %41 : vector<8x1xi1>, vector<8x1xf32>
    %c0_16 = arith.constant 0 : index
    %c0_17 = arith.constant 0 : index
    %43 = vector.load %arg3[%c0_16, %c0_17] : memref<8x1xf32, #tpu.memory_space<vmem>>, vector<8x1xf32>
    tpu.vector_store %arg3[%c0_16, %c0_17], %42 {strides = array<i32>} : memref<8x1xf32, #tpu.memory_space<vmem>>, vector<8x1xf32>,
    return
  }
  func.func @transform_0(%arg0: i32) -> (i32, i32) {
    %c0_i32 = arith.constant 0 : i32
    %c0_i32_0 = arith.constant 0 : i32
    return %arg0, %c0_i32 : i32, i32
  }
  func.func @transform_1(%arg0: i32) -> (i32, i32) {
    %c0_i32 = arith.constant 0 : i32
    %c0_i32_0 = arith.constant 0 : i32
    return %arg0, %c0_i32 : i32, i32
  }
  func.func @transform_2(%arg0: i32) -> (i32, i32) {
    %c0_i32 = arith.constant 0 : i32
    %c0_i32_0 = arith.constant 0 : i32
    return %arg0, %c0_i32 : i32, i32
  }
}

</mosaic_0001>

<llo_original>
// kernel: tpu_custom_call.1
$region0: #{tpu_custom_call.1}
  #allocation0 [shape = 'u32[]', space=smem, size = 0x4, offset = 0x4, fixed_abs, tag = 'smem constant byte address 0x4 - core index']
  #allocation1 [shape = 'u32[144,128]{1,0:T(1,128)}', space=vmem, size = 0x12000, scoped, tag = 'internal scratch']
  %s0 = inlined_call_operand.vmem [shape: f32[8,32], index: 0, kind: input, shape index: {}]
  %s1 = inlined_call_operand.vmem [shape: s32[8,1], index: 1, kind: input, shape index: {}]
  %s2 = inlined_call_operand.vmem [shape: f32[8,1], index: 2, kind: output, shape index: {}]
  %s3 = sld [smem:[#allocation0]]
  $region18: #{tpu_custom_call.1} parent=0
    _
  %s5 = ssub.s32 1, %s3
  %s6 = scalar_select 0, %s5, %s3
  // Predicated region
  $region2: #{tpu_custom_call.1} parent=0 // pred_check
    _
  $region3: #{tpu_custom_call.1} parent=0 // pred_check_branch
    %8 = sbr.rel (0) target = $region5
  $region4: #{tpu_custom_call.1} parent=0 // pred_region
    _
  $region5: #{tpu_custom_call.1} parent=0 // pred_fallthru
    _
  // Predicated region
  $region6: #{tpu_custom_call.1} parent=0 // pred_check
    _
  $region7: #{tpu_custom_call.1} parent=0 // pred_check_branch
    %10 = sbr.rel (0) target = $region9
  $region8: #{tpu_custom_call.1} parent=0 // pred_region
    _
  $region9: #{tpu_custom_call.1} parent=0 // pred_fallthru
    _
  %v11 = vld [vmem:[%s0] sm:$0xff]
  %v12 = vld [vmem:[%s1] sm:$0xff]
  %vm13 = vcmask 261120
  %v14 = vsel %vm13, %v11, -inf
  %15 = vmax.xlane.f32.xlu0 %v14
  %v16 = vpop.xlane.xlu0 %15
  %v17 = vsel %vm13, %v11, 0.0
  %18 = vadd.xlane.f32.xlu0 %v17
  %v19 = vpop.xlane.xlu0 %18
  %v20 = vlaneseq
  %v21 = vand.u32 %v20, 127
  %22 = vset.pattern.permute.xlu0 0
  %23 = vperm.xlu0 %22, %v12
  %v24 = vpop.permute.xlu0 %23
  %vm25 = vcmp.eq.s32.totalorder %v21, %v24
  %v26 = vsel %vm25, %v11, 0.0
  %v27 = vsel %vm13, %v26, 0.0
  %28 = vadd.xlane.f32.xlu0 %v27
  %v29 = vpop.xlane.xlu0 %28
  %v30 = vsub.f32 %v11, %v16
  %v31 = vmul.f32 %v30, 1.442695
  %v32 = vpow.pop %v31
  %v33 = vsel %vm13, %v32, 0.0
  %34 = vadd.xlane.f32.xlu0 %v33
  %v35 = vpop.xlane.xlu0 %34
  %v36 = vlog2.pop %v35
  %v37 = vmul.f32 %v36, 0.6931472
  %v38 = vadd.f32 %v16, %v37
  %v39 = vmul.f32 %v19, 0.03125
  %v40 = vmul.f32 %v29, 0.9
  %v41 = vsub.f32 %v38, %v40
  %v42 = vmul.f32 %v39, 0.1
  %v43 = vsub.f32 %v41, %v42
  %s44 = smul.u32 0, 8
  %v45 = vlaneseq
  %v46 = vshrl.u32 %v45, 7
  %v47 = vstv %s44
  %v48 = vadd.s32 %v47, %v46
  %vm49 = vcmp.lt.s32.totalorder %v48, 8
  %v50 = vsel %vm49, %v43, 0.0
  %vm51 = vcmask 7168
  %52 = vst.msk [vmem:[%s2] sm:$0xff] %vm51, %v50
  // Predicated region
  $region10: #{tpu_custom_call.1} parent=0 // pred_check
    _
  $region11: #{tpu_custom_call.1} parent=0 // pred_check_branch
    %54 = sbr.rel (0) target = $region13
  $region12: #{tpu_custom_call.1} parent=0 // pred_region
    _
  $region13: #{tpu_custom_call.1} parent=0 // pred_fallthru
    _
  // Predicated region
  $region14: #{tpu_custom_call.1} parent=0 // pred_check
    _
  $region15: #{tpu_custom_call.1} parent=0 // pred_check_branch
    %56 = sbr.rel (0) target = $region17
  $region16: #{tpu_custom_call.1} parent=0 // pred_region
    _
  $region17: #{tpu_custom_call.1} parent=0 // pred_fallthru
    _

</llo_original>
